<compile_context>
chip_gen: v5e
topology: v5e:2x2
jax: 0.10.0
libtpu: 0.0.40
codegen_flags: <defaults>
</compile_context>

<pallas_src>
import math

import jax
import jax.numpy as jnp
from jax.experimental import pallas as pl
from jax.experimental.pallas import tpu as pltpu


def _round_up(x: int, m: int) -> int:
    return ((x + m - 1) // m) * m


def _add_pe_kernel(x_ref, pe_ref, o_ref):
    # x_ref / o_ref: (tB, tS, D) block; pe_ref: (tS, D) float32, broadcast over tB.
    # Add in f32 (exact for f32 inputs; cheap converts for bf16), cast once on store.
    o_ref[...] = (x_ref[...].astype(jnp.float32) + pe_ref[...]).astype(o_ref.dtype)


class SinusoidalPositionalEncoding:
    """JAX/Pallas equivalent of the PyTorch SinusoidalPositionalEncoding module."""

    _VMEM_BLOCK_BUDGET = 20 * 1024 * 1024   # blocks budget, safe on v7x/v6e/v5e
    _MAX_SEQ_TILE = 512                     # ~85%+ of HBM roofline per measurements

    def __init__(self, d_model: int, max_len: int = 5000):
        assert d_model % 2 == 0, "d_model must be even (same as the PyTorch buffer)"
        self.d_model = d_model
        self.max_len = max_len
        # Precompute the PE buffer exactly like the PyTorch register_buffer.
        position = jnp.arange(max_len, dtype=jnp.float32)[:, None]            # (L, 1)
        div_term = jnp.exp(jnp.arange(0, d_model, 2, dtype=jnp.float32)
                           * (-math.log(10000.0) / d_model))                  # (D/2,)
        angles = position * div_term                                          # (L, D/2)
        pe = jnp.zeros((max_len, d_model), jnp.float32)
        pe = pe.at[:, 0::2].set(jnp.sin(angles))
        pe = pe.at[:, 1::2].set(jnp.cos(angles))
        self.pe = pe   # (max_len, d_model) float32 buffer, lives in HBM

    def __call__(self, x: jax.Array) -> jax.Array:
        # x: [batch, seq_len, d_model]   (output dtype == x.dtype)
        B, S, D = x.shape
        assert D == self.d_model
        assert S <= self.max_len

        itemsize = jnp.dtype(x.dtype).itemsize
        budget = self._VMEM_BLOCK_BUDGET

        # ---- seq tile: multiple of 8, VMEM-budgeted, capped at 512 rows ----
        # per seq-row (tB=1): double-buffered in + out blocks + f32 PE block.
        per_row = 2 * (2 * D * itemsize) + 2 * D * 4
        cap_rows = max(8, (budget // per_row) // 8 * 8)
        tS = min(self._MAX_SEQ_TILE, cap_rows, _round_up(S, 8))
        num_s = pl.cdiv(S, tS)

        # ---- fold batch rows into the block to amortize per-step overhead ----
        pe_bytes = 2 * tS * D * 4
        per_batch_row = 2 * (2 * tS * D * itemsize)
        tB = max(1, min(B, (budget - pe_bytes) // max(per_batch_row, 1)))
        num_b = pl.cdiv(B, tB)

        out = pl.pallas_call(
            _add_pe_kernel,
            out_shape=jax.ShapeDtypeStruct((B, S, D), x.dtype),
            grid=(num_s, num_b),   # batch innermost -> PE block re-DMA is skipped
            in_specs=[
                pl.BlockSpec((tB, tS, D), lambda s, b: (b, s, 0)),
                # Reads rows [s*tS, (s+1)*tS) straight out of the max_len buffer.
                pl.BlockSpec((tS, D), lambda s, b: (s, 0)),
            ],
            out_specs=pl.BlockSpec((tB, tS, D), lambda s, b: (b, s, 0)),
            compiler_params=pltpu.CompilerParams(
                dimension_semantics=("parallel", "parallel"),
                vmem_limit_bytes=32 * 1024 * 1024,
            ),
            cost_estimate=pl.CostEstimate(
                flops=B * S * D,                                   # the adds
                transcendentals=0,                                 # PE precomputed
                bytes_accessed=2 * B * S * D * itemsize + S * D * 4,
            ),
        )(x, self.pe)
        return out


def _reference(x: jax.Array) -> jax.Array:
    # Pure-JAX reference matching the PyTorch buffer construction + forward.
    B, S, D = x.shape
    position = jnp.arange(S, dtype=jnp.float32)[:, None]                      # (S, 1)
    div_term = jnp.exp(jnp.arange(0, D, 2, dtype=jnp.float32)
                       * (-math.log(10000.0) / D))                            # (D//2,)
    pe = jnp.zeros((S, D), jnp.float32)
    pe = pe.at[:, 0::2].set(jnp.sin(position * div_term))
    pe = pe.at[:, 1::2].set(jnp.cos(position * div_term))
    return (x.astype(jnp.float32) + pe[None]).astype(x.dtype)


if __name__ == "__main__":
    key = jax.random.PRNGKey(0)
    k1, k2 = jax.random.split(key)

    # Case 1: small d_model (not a multiple of 128; block last dim == full D).
    B, S, D = 2, 8, 32
    x = jax.random.normal(k1, (B, S, D), dtype=jnp.float32)
    out = SinusoidalPositionalEncoding(d_model=D, max_len=5000)(x)
    out = jax.block_until_ready(out)
    assert out.shape == (B, S, D) and out.dtype == x.dtype
    assert jnp.allclose(out, _reference(x), atol=1e-5, rtol=1e-5)

    # Case 2: d_model a multiple of 128 (fully lane-dense blocks).
    B2, S2, D2 = 2, 16, 128
    x2 = jax.random.normal(k2, (B2, S2, D2), dtype=jnp.float32)
    out2 = SinusoidalPositionalEncoding(d_model=D2, max_len=5000)(x2)
    out2 = jax.block_until_ready(out2)
    assert jnp.allclose(out2, _reference(x2), atol=1e-5, rtol=1e-5)

    print("KERNEL_OK")
</pallas_src>

<mosaic_0001>
module attributes {stable_mosaic.version = 11 : i64} {
  func.func @_add_pe_kernel(%arg0: i32, %arg1: i32, %arg2: memref<2x8x32xf32, #tpu.memory_space<vmem>>, %arg3: memref<8x32xf32, #tpu.memory_space<vmem>>, %arg4: memref<2x8x32xf32, #tpu.memory_space<vmem>>) attributes {dimension_semantics = [#tpu.dimension_semantics<parallel>, #tpu.dimension_semantics<parallel>], iteration_bounds = array<i64: 1, 1>, scalar_prefetch = 0 : i64, scratch_operands = 0 : i64, tpu.core_type = #tpu.core_type<tc>, window_params = [{transform_indices = @transform_0, window_bounds = array<i64: 2, 8, 32>}, {transform_indices = @transform_1, window_bounds = array<i64: 8, 32>}, {transform_indices = @transform_2, window_bounds = array<i64: 2, 8, 32>}]} {
    %c0 = arith.constant 0 : index
    %c0_0 = arith.constant 0 : index
    %c0_1 = arith.constant 0 : index
    %0 = vector.load %arg2[%c0, %c0_0, %c0_1] : memref<2x8x32xf32, #tpu.memory_space<vmem>>, vector<2x8x32xf32>
    %c0_2 = arith.constant 0 : index
    %c0_3 = arith.constant 0 : index
    %1 = vector.load %arg3[%c0_2, %c0_3] : memref<8x32xf32, #tpu.memory_space<vmem>>, vector<8x32xf32>
    %2 = vector.shape_cast %1 : vector<8x32xf32> to vector<1x8x32xf32>
    %3 = vector.broadcast %2 : vector<1x8x32xf32> to vector<2x8x32xf32>
    %4 = arith.addf %0, %3 : vector<2x8x32xf32>
    %c0_4 = arith.constant 0 : index
    %c0_5 = arith.constant 0 : index
    %c0_6 = arith.constant 0 : index
    %5 = vector.load %arg4[%c0_4, %c0_5, %c0_6] : memref<2x8x32xf32, #tpu.memory_space<vmem>>, vector<2x8x32xf32>
    tpu.vector_store %arg4[%c0_4, %c0_5, %c0_6], %4 {strides = array<i32>} : memref<2x8x32xf32, #tpu.memory_space<vmem>>, vector<2x8x32xf32>,
    return
  }
  func.func @transform_0(%arg0: i32, %arg1: i32) -> (i32, i32, i32) {
    %c0_i32 = arith.constant 0 : i32
    %c0_i32_0 = arith.constant 0 : i32
    return %arg1, %arg0, %c0_i32 : i32, i32, i32
  }
  func.func @transform_1(%arg0: i32, %arg1: i32) -> (i32, i32) {
    %c0_i32 = arith.constant 0 : i32
    %c0_i32_0 = arith.constant 0 : i32
    return %arg0, %c0_i32 : i32, i32
  }
  func.func @transform_2(%arg0: i32, %arg1: i32) -> (i32, i32, i32) {
    %c0_i32 = arith.constant 0 : i32
    %c0_i32_0 = arith.constant 0 : i32
    return %arg1, %arg0, %c0_i32 : i32, i32, i32
  }
}

</mosaic_0001>

<llo_original>
// kernel: tpu_custom_call.1
$region0: #{tpu_custom_call.1}
  #allocation0 [shape = 'u32[]', space=smem, size = 0x4, offset = 0x4, fixed_abs, tag = 'smem constant byte address 0x4 - core index']
  #allocation1 [shape = 'u32[72,128]{1,0:T(1,128)}', space=vmem, size = 0x9000, scoped, tag = 'internal scratch']
  %s0 = inlined_call_operand.vmem [shape: f32[2,8,32], index: 0, kind: input, shape index: {}]
  %s1 = inlined_call_operand.vmem [shape: f32[5000,32], index: 1, kind: input, shape index: {}]
  %s2 = inlined_call_operand.hbm [shape: f32[2,8,32], index: 2, kind: output, shape index: {}]
  %s3 = sld [smem:[#allocation0]]
  $region18: #{tpu_custom_call.1} parent=0
    _
  %s5 = ssub.s32 1, %s3
  %s6 = scalar_select 0, %s5, %s3
  $region1: #{tpu_custom_call.1} parent=0
    #allocation2 [shape = 'u8[8192]{0}', space=vmem, size = 0x2000, scoped, tag = 'output window, operand 0, single buffered']
    #allocation3 [shape = 's32[1]{0}', space=sflag, size = 0x4, scoped, tag = 'scoped memory for tpu_custom_call.1']
    %7 = vsyncpa [#allocation3], 0
    // Predicated region
    $region2: #{tpu_custom_call.1} parent=1 // pred_check
      _
    $region3: #{tpu_custom_call.1} parent=1 // pred_check_branch
      %9 = sbr.rel (0) target = $region5
    $region4: #{tpu_custom_call.1} parent=1 // pred_region
      _
    $region5: #{tpu_custom_call.1} parent=1 // pred_fallthru
      _
    // Predicated region
    $region6: #{tpu_custom_call.1} parent=1 // pred_check
      _
    $region7: #{tpu_custom_call.1} parent=1 // pred_check_branch
      %11 = sbr.rel (0) target = $region9
    $region8: #{tpu_custom_call.1} parent=1 // pred_region
      _
    $region9: #{tpu_custom_call.1} parent=1 // pred_fallthru
      _
    %v12 = vld [vmem:[%s0] sm:$0xff]
    %v13 = vld [vmem:[%s0 + $0x8] sm:$0xff]
    %v14 = vld [vmem:[%s1] sm:$0xff]
    %v15 = vadd.f32 %v12, %v14
    %v16 = vadd.f32 %v13, %v14
    %vm17 = vcmask 261120
    %18 = vst.msk [vmem:[#allocation2] sm:$0xff] %vm17, %v15
    %19 = vst.msk [vmem:[#allocation2 + $0x8] sm:$0xff] %vm17, %v16
    // Predicated region
    $region10: #{tpu_custom_call.1} parent=1 // pred_check
      _
    $region11: #{tpu_custom_call.1} parent=1 // pred_check_branch
      %21 = sbr.rel (0) target = $region13
    $region12: #{tpu_custom_call.1} parent=1 // pred_region
      %23 = vsyncadd [#allocation3], 0
      %s24 = sshll.u32 [#allocation2], 4
      %s25 = int_to_ptr.vmem [resolvable:$true] %s24
      %s26 = sshll.u32 %s2, 4
      %s27 = int_to_ptr.hbm [resolvable:$true] %s26
      %32 = dma.vmem_to_hbm [thread:$0]  %s25, 256, %s27, [#allocation3], 128, 128, 8
    $region13: #{tpu_custom_call.1} parent=1 // pred_fallthru
      _
    // Predicated region
    $region14: #{tpu_custom_call.1} parent=1 // pred_check
      _
    $region15: #{tpu_custom_call.1} parent=1 // pred_check_branch
      %34 = sbr.rel (0) target = $region17
    $region16: #{tpu_custom_call.1} parent=1 // pred_region
      %36 = dma.done [#allocation3], 256
    $region17: #{tpu_custom_call.1} parent=1 // pred_fallthru
      _
    %37 = vsyncpa [#allocation3], 1

</llo_original>
